<compile_context>
chip_gen: v7x
topology: tpu7x:2x2x1
jax: 0.10.0
libtpu: 0.0.40
codegen_flags: <defaults>
</compile_context>

<pallas_src>
import functools

import jax
import jax.numpy as jnp
from jax.experimental import pallas as pl
from jax.experimental.pallas import tpu as pltpu


_MIB = 1024 * 1024
# Multi-MiB input blocks are needed to amortize the ~0.35 us per-grid-step
# pipeline overhead and reach ~85% of the HBM roofline.
_TARGET_BLOCK_BYTES = 4 * _MIB


def _vmem_budgets():
    """(vmem_limit_bytes, per-call block budget), generation aware.

    v5e/v6e: 128 MiB physical VMEM per core -> 48 / 24 MiB.
    v7x:      64 MiB physical VMEM per core -> 36 / 14 MiB (blocks stay
              >= ~2 MiB, still at the HBM roofline, but leave headroom).
    """
    cap = 128 * _MIB
    try:
        cap = int(pltpu.get_tpu_info().vmem_capacity_bytes)
    except Exception:  # not on TPU / API unavailable -> assume larger VMEM
        pass
    if cap >= 96 * _MIB:
        return 48 * _MIB, 24 * _MIB
    return 36 * _MIB, 14 * _MIB


def _pick_tile_rows(n_rows, d_lanes, itemsize, pack, block_budget_bytes):
    """Bytes-based row-tile selection (no fixed row cap)."""
    row_in_bytes = d_lanes * itemsize
    # Size the input tile toward the multi-MiB target ...
    tile = max(pack, _TARGET_BLOCK_BYTES // max(row_in_bytes, 1))
    # ... but keep the pipeline footprint under the VMEM budget:
    # 2x double-buffered input + 2x output (same dtype) + ~3 f32 temporaries.
    per_row_vmem = 4 * row_in_bytes + 3 * d_lanes * 4
    tile = min(tile, max(pack, block_budget_bytes // per_row_vmem))
    # Keep >= ~4 grid steps when there is enough work: feeds both v7x
    # TensorCores via the "parallel" axis and keeps the input-DMA / compute /
    # output-DMA double-buffer pipeline overlapped.
    if n_rows >= 4 * pack:
        tile = min(tile, max(pack, (pl.cdiv(n_rows, 4) // pack) * pack))
    if tile >= n_rows:
        return n_rows
    return max(pack, (tile // pack) * pack)


def _nodenorm_kernel(x_ref, o_ref, *, eps, exponent, inv_d, inv_denom):
    """Generic path: reduce over the (lane) feature axis of a (tile, D) block."""
    x = x_ref[...].astype(jnp.float32)
    mean = jnp.sum(x, axis=-1, keepdims=True) * inv_d
    centered = x - mean
    var = jnp.sum(centered * centered, axis=-1, keepdims=True) * inv_denom
    # out = x / std**power, std = sqrt(var + eps)  ==>  x * (var+eps)**(-exponent)
    if exponent == 0.5:  # root_power == 1 -> plain rsqrt (no log/exp)
        scale = jax.lax.rsqrt(var + eps)
    else:
        scale = jnp.exp(-exponent * jnp.log(var + eps))
    # Reuse the already-upcast f32 tile; single cast to the output dtype.
    o_ref[...] = (x * scale).astype(o_ref.dtype)


def _nodenorm_packed_kernel(x_ref, seg_ref, o_ref, *, eps, exponent, inv_d,
                            inv_denom):
    """Lane-packed path: each 128-lane row holds 128//D independent rows.

    The segmented (per original row) reduction is a matmul with a 0/1
    block-diagonal segment matrix: cheap MXU work that overlaps the HBM
    stream while keeping every load / VPU op / store lane-dense.
    """
    x = x_ref[...].astype(jnp.float32)
    seg = seg_ref[...]  # (128, 128) f32, seg[i, j] = (i // D == j // D)
    mean = jnp.dot(x, seg, precision=jax.lax.Precision.HIGHEST,
                   preferred_element_type=jnp.float32) * inv_d
    centered = x - mean
    var = jnp.dot(centered * centered, seg,
                  precision=jax.lax.Precision.HIGHEST,
                  preferred_element_type=jnp.float32) * inv_denom
    if exponent == 0.5:
        scale = jax.lax.rsqrt(var + eps)
    else:
        scale = jnp.exp(-exponent * jnp.log(var + eps))
    o_ref[...] = (x * scale).astype(o_ref.dtype)


def _segment_matrix(d):
    seg_id = jnp.arange(128, dtype=jnp.int32) // d
    return (seg_id[:, None] == seg_id[None, :]).astype(jnp.float32)


def node_norm(x: jax.Array,
              unbiased: bool = False,
              eps: float = 1e-5,
              root_power: float = 3.0,
              tile_rows: int | None = None) -> jax.Array:
    """NodeNorm forward: x / sqrt(var(x, axis=-1) + eps) ** (1/root_power)."""
    orig_shape = x.shape
    d = orig_shape[-1]
    x2 = x.reshape(-1, d)
    rows = x2.shape[0]
    itemsize = jnp.dtype(x.dtype).itemsize
    # Sublane packing: 8 rows for 4-byte dtypes, 16 for 2-byte, 32 for 1-byte.
    pack = max(8, 32 // itemsize)

    vmem_limit, block_budget = _vmem_budgets()

    exponent = 0.5 / root_power          # out = x * (var + eps)**(-exponent)
    denom = max(d - 1, 1) if unbiased else d
    inv_d, inv_denom = 1.0 / d, 1.0 / denom

    # Lane-dense packing for narrow feature dims.
    use_packed = (d < 128) and (128 % d == 0) and (rows % (128 // d) == 0)
    # TODO(synk): lane-sparse d that does not divide 128 (e.g. 48, 96) still
    # runs the lane-padded generic path.

    if use_packed:
        g = 128 // d
        n_rows, d_lanes = rows // g, 128
        x_in = x2.reshape(n_rows, d_lanes)
    else:
        n_rows, d_lanes = rows, d
        x_in = x2

    if tile_rows is not None:
        tile = min(max(pack, (int(tile_rows) // pack) * pack), n_rows)
    else:
        tile = _pick_tile_rows(n_rows, d_lanes, itemsize, pack, block_budget)
    # Never go below one sublane-packed tile: keeps MXU operands (packed path)
    # and partial blocks on the natively tiled layout.
    tile = max(tile, pack)
    grid = (pl.cdiv(n_rows, tile),)

    if use_packed:
        kernel = functools.partial(_nodenorm_packed_kernel, eps=float(eps),
                                   exponent=exponent, inv_d=inv_d,
                                   inv_denom=inv_denom)
        in_specs = [pl.BlockSpec((tile, d_lanes), lambda i: (i, 0)),
                    pl.BlockSpec((128, 128), lambda i: (0, 0))]
        operands = (x_in, _segment_matrix(d))
        flops = 4 * n_rows * 128 * 128 + 4 * rows * d
        transcendentals = 0 if exponent == 0.5 else 2 * rows * d
    else:
        kernel = functools.partial(_nodenorm_kernel, eps=float(eps),
                                   exponent=exponent, inv_d=inv_d,
                                   inv_denom=inv_denom)
        in_specs = [pl.BlockSpec((tile, d_lanes), lambda i: (i, 0))]
        operands = (x_in,)
        flops = 6 * rows * d
        transcendentals = 0 if exponent == 0.5 else 2 * rows

    out = pl.pallas_call(
        kernel,
        out_shape=jax.ShapeDtypeStruct((n_rows, d_lanes), x.dtype),
        grid_spec=pltpu.PrefetchScalarGridSpec(
            num_scalar_prefetch=0,
            grid=grid,
            in_specs=in_specs,
            out_specs=pl.BlockSpec((tile, d_lanes), lambda i: (i, 0)),
        ),
        compiler_params=pltpu.CompilerParams(
            dimension_semantics=("parallel",),
            vmem_limit_bytes=vmem_limit,
        ),
        cost_estimate=pl.CostEstimate(
            flops=int(flops),
            transcendentals=int(transcendentals),
            bytes_accessed=int(2 * rows * d * itemsize),
        ),
    )(*operands)

    return out.reshape(orig_shape)


def _node_norm_ref(x, unbiased=False, eps=1e-5, root_power=3.0):
    x32 = x.astype(jnp.float32)
    var = jnp.var(x32, axis=-1, keepdims=True, ddof=1 if unbiased else 0)
    std = jnp.sqrt(var + eps)
    return (x32 / std ** (1.0 / root_power)).astype(x.dtype)


if __name__ == "__main__":
    key = jax.random.PRNGKey(0)
    k0, k1, k2 = jax.random.split(key, 3)

    # 1) Lane-packed path: batch=2, seq=8, hidden=32 (D=32 -> 4 rows / lane row).
    x = jax.random.normal(k0, (2, 8, 32), dtype=jnp.float32)
    out = jax.block_until_ready(node_norm(x))
    ref = _node_norm_ref(x)
    assert out.shape == x.shape and out.dtype == x.dtype
    assert jnp.allclose(out, ref, atol=2e-5, rtol=2e-4), "mismatch (packed path)"

    # 2) Generic path (D=48 does not divide 128) with a partial boundary block.
    x2 = jax.random.normal(k1, (20, 48), dtype=jnp.float32)
    out2 = jax.block_until_ready(node_norm(x2, tile_rows=8))
    ref2 = _node_norm_ref(x2)
    assert jnp.allclose(out2, ref2, atol=2e-5, rtol=2e-4), "mismatch (generic path)"

    # 3) rsqrt fast path (root_power == 1).
    out3 = jax.block_until_ready(node_norm(x2, root_power=1.0))
    ref3 = _node_norm_ref(x2, root_power=1.0)
    assert jnp.allclose(out3, ref3, atol=2e-5, rtol=2e-4), "mismatch (rsqrt path)"

    # 4) bf16 input through the packed path (D=64 -> 2 rows / lane row).
    x4 = jax.random.normal(k2, (16, 64), dtype=jnp.float32).astype(jnp.bfloat16)
    out4 = jax.block_until_ready(node_norm(x4))
    ref4 = _node_norm_ref(x4)
    assert out4.dtype == jnp.bfloat16 and out4.shape == x4.shape
    assert jnp.allclose(out4.astype(jnp.float32), ref4.astype(jnp.float32),
                        atol=3e-2, rtol=3e-2), "mismatch (bf16 packed)"

    print("KERNEL_OK")
</pallas_src>

<mosaic_0001>
module attributes {stable_mosaic.version = 11 : i64} {
  func.func @_nodenorm_packed_kernel(%arg0: i32, %arg1: memref<8x128xf32, #tpu.memory_space<vmem>>, %arg2: memref<128x128xf32, #tpu.memory_space<vmem>>, %arg3: memref<8x128xf32, #tpu.memory_space<vmem>>) attributes {dimension_semantics = [#tpu.dimension_semantics<parallel>], iteration_bounds = array<i64: 1>, scalar_prefetch = 0 : i64, scratch_operands = 0 : i64, tpu.core_type = #tpu.core_type<tc>, window_params = [{transform_indices = @transform_0, window_bounds = array<i64: 8, 128>}, {pipeline_mode = #tpu.pipeline_mode<synchronous>, transform_indices = @transform_1, window_bounds = array<i64: 128, 128>}, {transform_indices = @transform_2, window_bounds = array<i64: 8, 128>}]} {
    %c0 = arith.constant 0 : index
    %c0_0 = arith.constant 0 : index
    %0 = vector.load %arg1[%c0, %c0_0] : memref<8x128xf32, #tpu.memory_space<vmem>>, vector<8x128xf32>
    %c0_1 = arith.constant 0 : index
    %c0_2 = arith.constant 0 : index
    %1 = vector.load %arg2[%c0_1, %c0_2] : memref<128x128xf32, #tpu.memory_space<vmem>>, vector<128x128xf32>
    %cst = arith.constant dense<0.000000e+00> : vector<8x128xf32>
    %2 = tpu.matmul %0, %1, %cst {dimension_numbers = #tpu.dot_dimension_numbers<[1], [0], [0], [1], [0, 0, 1, 1], [], []>, precision = #tpu.contract_precision<fp32>} : vector<8x128xf32>, vector<128x128xf32>, vector<8x128xf32> -> vector<8x128xf32>
    %cst_3 = arith.constant 3.125000e-02 : f32
    %3 = vector.broadcast %cst_3 : f32 to vector<8x128xf32>
    %4 = arith.mulf %2, %3 : vector<8x128xf32>
    %5 = arith.subf %0, %4 : vector<8x128xf32>
    %6 = arith.mulf %5, %5 : vector<8x128xf32>
    %cst_4 = arith.constant dense<0.000000e+00> : vector<8x128xf32>
    %7 = tpu.matmul %6, %1, %cst_4 {dimension_numbers = #tpu.dot_dimension_numbers<[1], [0], [0], [1], [0, 0, 1, 1], [], []>, precision = #tpu.contract_precision<fp32>} : vector<8x128xf32>, vector<128x128xf32>, vector<8x128xf32> -> vector<8x128xf32>
    %cst_5 = arith.constant 3.125000e-02 : f32
    %8 = vector.broadcast %cst_5 : f32 to vector<8x128xf32>
    %9 = arith.mulf %7, %8 : vector<8x128xf32>
    %cst_6 = arith.constant 9.99999974E-6 : f32
    %10 = vector.broadcast %cst_6 : f32 to vector<8x128xf32>
    %11 = arith.addf %9, %10 : vector<8x128xf32>
    %12 = math.log %11 : vector<8x128xf32>
    %cst_7 = arith.constant -0.166666672 : f32
    %13 = vector.broadcast %cst_7 : f32 to vector<8x128xf32>
    %14 = arith.mulf %13, %12 : vector<8x128xf32>
    %15 = math.exp %14 : vector<8x128xf32>
    %16 = arith.mulf %0, %15 : vector<8x128xf32>
    %c0_8 = arith.constant 0 : index
    %c0_9 = arith.constant 0 : index
    %17 = vector.load %arg3[%c0_8, %c0_9] : memref<8x128xf32, #tpu.memory_space<vmem>>, vector<8x128xf32>
    tpu.vector_store %arg3[%c0_8, %c0_9], %16 {strides = array<i32>} : memref<8x128xf32, #tpu.memory_space<vmem>>, vector<8x128xf32>,
    return
  }
  func.func @transform_0(%arg0: i32) -> (i32, i32) {
    %c0_i32 = arith.constant 0 : i32
    %c0_i32_0 = arith.constant 0 : i32
    return %arg0, %c0_i32 : i32, i32
  }
  func.func @transform_1(%arg0: i32) -> (i32, i32) {
    %c0_i32 = arith.constant 0 : i32
    %c0_i32_0 = arith.constant 0 : i32
    %c0_i32_1 = arith.constant 0 : i32
    return %c0_i32, %c0_i32_0 : i32, i32
  }
  func.func @transform_2(%arg0: i32) -> (i32, i32) {
    %c0_i32 = arith.constant 0 : i32
    %c0_i32_0 = arith.constant 0 : i32
    return %arg0, %c0_i32 : i32, i32
  }
}

</mosaic_0001>

<llo_original>
// kernel: tpu_custom_call.1
$region0: #{tpu_custom_call.1}
  #allocation0 [shape = 'u32[]', space=smem, size = 0x4, offset = 0x4, fixed_abs, tag = 'smem constant byte address 0x4 - core index']
  #allocation1 [shape = 'u32[144,128]{1,0:T(1,128)}', space=vmem, size = 0x12000, scoped, tag = 'internal scratch']
  %s0 = inlined_call_operand.hbm [shape: f32[4,128], index: 0, kind: input, shape index: {}]
  %s1 = inlined_call_operand.hbm [shape: f32[128,128], index: 1, kind: input, shape index: {}]
  %s2 = inlined_call_operand.hbm [shape: f32[4,128], index: 2, kind: output, shape index: {}]
  %s3 = sld [smem:[#allocation0]]
  $region26: #{tpu_custom_call.1} parent=0
    _
  %s5 = ssub.s32 1, %s3
  %s6 = scalar_select 0, %s5, %s3
  $region1: #{tpu_custom_call.1} parent=0
    #allocation2 [shape = 'u8[4096]{0}', space=vmem, size = 0x1000, scoped, tag = 'input window, operand 0, single buffered']
    #allocation3 [shape = 's32[1]{0}', space=sflag, size = 0x4, scoped, tag = 'scoped memory for tpu_custom_call.1']
    #allocation4 [shape = 's32[1]{0}', space=sflag, size = 0x4, scoped, tag = 'scoped memory for tpu_custom_call.1']
    #allocation5 [shape = 'u8[65536]{0}', space=vmem, size = 0x10000, scoped, tag = 'input window, operand 1, single buffered']
    #allocation6 [shape = 's32[1]{0}', space=sflag, size = 0x4, scoped, tag = 'scoped memory for tpu_custom_call.1']
    #allocation7 [shape = 'u8[4096]{0}', space=vmem, size = 0x1000, scoped, tag = 'output window, operand 0, single buffered']
    %7 = vsyncpa [#allocation3], 0
    %8 = vsyncpa [#allocation6], 0
    %9 = vsyncpa [#allocation4], 0
    // Predicated region
    $region2: #{tpu_custom_call.1} parent=1 // pred_check
      _
    $region3: #{tpu_custom_call.1} parent=1 // pred_check_branch
      %11 = sbr.rel (0) target = $region5
    $region4: #{tpu_custom_call.1} parent=1 // pred_region
      %s13 = ssub.s32 128, 64
      %14 = vsyncadd [#allocation3], %s13
      %s15 = sshll.u32 [#allocation2], 4
      %s16 = int_to_ptr.vmem [resolvable:$true] %s15
      %21 = dma.hbm_to_vmem [thread:$0]  %s0, 64, %s16, [#allocation3], 64, 64, 4
    $region5: #{tpu_custom_call.1} parent=1 // pred_fallthru
      _
    // Predicated region
    $region6: #{tpu_custom_call.1} parent=1 // pred_check
      _
    $region7: #{tpu_custom_call.1} parent=1 // pred_check_branch
      %23 = sbr.rel (0) target = $region9
    $region8: #{tpu_custom_call.1} parent=1 // pred_region
      %s25 = ssub.s32 2048, 2048
      %26 = vsyncadd [#allocation6], %s25
      %s27 = sshll.u32 [#allocation5], 4
      %s28 = int_to_ptr.vmem [resolvable:$true] %s27
      %33 = dma.hbm_to_vmem [thread:$0]  %s1, 2048, %s28, [#allocation6], 128, 128, 8
    $region9: #{tpu_custom_call.1} parent=1 // pred_fallthru
      _
    // Predicated region
    $region10: #{tpu_custom_call.1} parent=1 // pred_check
      _
    $region11: #{tpu_custom_call.1} parent=1 // pred_check_branch
      %35 = sbr.rel (0) target = $region13
    $region12: #{tpu_custom_call.1} parent=1 // pred_region
      %36 = dma.done [#allocation3], 128
    $region13: #{tpu_custom_call.1} parent=1 // pred_fallthru
      _
    // Predicated region
    $region14: #{tpu_custom_call.1} parent=1 // pred_check
      _
    $region15: #{tpu_custom_call.1} parent=1 // pred_check_branch
      %38 = sbr.rel (0) target = $region17
    $region16: #{tpu_custom_call.1} parent=1 // pred_region
      %39 = dma.done [#allocation6], 2048
    $region17: #{tpu_custom_call.1} parent=1 // pred_fallthru
      _
    %v40 = vld [vmem:[#allocation2] sm:$0xff]
    %v41 = vld [vmem:[#allocation5] sm:$0xff]
    %v42 = vld [vmem:[#allocation5 + $0x8] sm:$0xff]
    %v43 = vld [vmem:[#allocation5 + $0x10] sm:$0xff]
    %v44 = vld [vmem:[#allocation5 + $0x18] sm:$0xff]
    %v45 = vld [vmem:[#allocation5 + $0x20] sm:$0xff]
    %v46 = vld [vmem:[#allocation5 + $0x28] sm:$0xff]
    %v47 = vld [vmem:[#allocation5 + $0x30] sm:$0xff]
    %v48 = vld [vmem:[#allocation5 + $0x38] sm:$0xff]
    %v49 = vld [vmem:[#allocation5 + $0x40] sm:$0xff]
    %v50 = vld [vmem:[#allocation5 + $0x48] sm:$0xff]
    %v51 = vld [vmem:[#allocation5 + $0x50] sm:$0xff]
    %v52 = vld [vmem:[#allocation5 + $0x58] sm:$0xff]
    %v53 = vld [vmem:[#allocation5 + $0x60] sm:$0xff]
    %v54 = vld [vmem:[#allocation5 + $0x68] sm:$0xff]
    %v55 = vld [vmem:[#allocation5 + $0x70] sm:$0xff]
    %v56 = vld [vmem:[#allocation5 + $0x78] sm:$0xff]
    %57 = vmatprep.subr.mxu0 0.0
    %v58 = vand.u32 %v41, 4294901760
    %59 = vmatpush1.msra.mxu0 %v58
    %60 = vmatprep.subr.mxu0 0.0
    %v61 = vand.u32 %v42, 4294901760
    %62 = vmatpush1.msra.mxu0 %v61
    %63 = vmatprep.subr.mxu0 0.0
    %v64 = vand.u32 %v43, 4294901760
    %65 = vmatpush1.msra.mxu0 %v64
    %66 = vmatprep.subr.mxu0 0.0
    %v67 = vand.u32 %v44, 4294901760
    %68 = vmatpush1.msra.mxu0 %v67
    %69 = vmatprep.subr.mxu0 0.0
    %v70 = vand.u32 %v45, 4294901760
    %71 = vmatpush1.msra.mxu0 %v70
    %72 = vmatprep.subr.mxu0 0.0
    %v73 = vand.u32 %v46, 4294901760
    %74 = vmatpush1.msra.mxu0 %v73
    %75 = vmatprep.subr.mxu0 0.0
    %v76 = vand.u32 %v47, 4294901760
    %77 = vmatpush1.msra.mxu0 %v76
    %78 = vmatprep.subr.mxu0 0.0
    %v79 = vand.u32 %v48, 4294901760
    %80 = vmatpush1.msra.mxu0 %v79
    %81 = vmatprep.subr.mxu0 0.0
    %v82 = vand.u32 %v49, 4294901760
    %83 = vmatpush1.msra.mxu0 %v82
    %84 = vmatprep.subr.mxu0 0.0
    %v85 = vand.u32 %v50, 4294901760
    %86 = vmatpush1.msra.mxu0 %v85
    %87 = vmatprep.subr.mxu0 0.0
    %v88 = vand.u32 %v51, 4294901760
    %89 = vmatpush1.msra.mxu0 %v88
    %90 = vmatprep.subr.mxu0 0.0
    %v91 = vand.u32 %v52, 4294901760
    %92 = vmatpush1.msra.mxu0 %v91
    %93 = vmatprep.subr.mxu0 0.0
    %v94 = vand.u32 %v53, 4294901760
    %95 = vmatpush1.msra.mxu0 %v94
    %96 = vmatprep.subr.mxu0 0.0
    %v97 = vand.u32 %v54, 4294901760
    %98 = vmatpush1.msra.mxu0 %v97
    %99 = vmatprep.subr.mxu0 0.0
    %v100 = vand.u32 %v55, 4294901760
    %101 = vmatpush1.msra.mxu0 %v100
    %102 = vmatprep.subr.mxu0 0.0
    %v103 = vand.u32 %v56, 4294901760
    %104 = vmatpush1.msra.mxu0 %v103
    %105 = vmatprep.subr.mxu0 0.0
    %106 = vmatpush1.msra.mxu0 0.0
    %107 = vmatprep.subr.mxu0 0.0
    %108 = vmatpush1.msra.mxu0 0.0
    %109 = vmatprep.subr.mxu0 0.0
    %110 = vmatpush1.msra.mxu0 0.0
    %111 = vmatprep.subr.mxu0 0.0
    %112 = vmatpush1.msra.mxu0 0.0
    %113 = vmatprep.subr.mxu0 0.0
    %114 = vmatpush1.msra.mxu0 0.0
    %115 = vmatprep.subr.mxu0 0.0
    %116 = vmatpush1.msra.mxu0 0.0
    %117 = vmatprep.subr.mxu0 0.0
    %118 = vmatpush1.msra.mxu0 0.0
    %119 = vmatprep.subr.mxu0 0.0
    %120 = vmatpush1.msra.mxu0 0.0
    %121 = vmatprep.subr.mxu0 0.0
    %122 = vmatpush1.msra.mxu0 0.0
    %123 = vmatprep.subr.mxu0 0.0
    %124 = vmatpush1.msra.mxu0 0.0
    %125 = vmatprep.subr.mxu0 0.0
    %126 = vmatpush1.msra.mxu0 0.0
    %127 = vmatprep.subr.mxu0 0.0
    %128 = vmatpush1.msra.mxu0 0.0
    %129 = vmatprep.subr.mxu0 0.0
    %130 = vmatpush1.msra.mxu0 0.0
    %131 = vmatprep.subr.mxu0 0.0
    %132 = vmatpush1.msra.mxu0 0.0
    %133 = vmatprep.subr.mxu0 0.0
    %134 = vmatpush1.msra.mxu0 0.0
    %135 = vmatprep.subr.mxu0 0.0
    %136 = vmatpush1.msra.mxu0 0.0
    %137 = vmatprep.mubr.f32.mxu0 0.0
    %v138 = vand.u32 %v40, 4294901760
    %v139 = vsub.f32 %v40, %v138
    %v140 = vand.u32 %v139, 4294901760
    %v141 = vsub.f32 %v139, %v140
    %v142 = vand.u32 %v141, 4294901760
    %143 = vmatmul.mubr.f32.gmra.mrb[0].mxu0 %v142
    %v144 = vpop.f32.mrb[0].mxu0
    %v145 = vadd.f32 0.0, %v144
    %v146 = vpop.f32.mrb[0].mxu0
    %147 = vdwg.mxu0
    %148 = vmatprep.subr.mxu0 0.0
    %v149 = vand.u32 %v41, 4294901760
    %v150 = vsub.f32 %v41, %v149
    %v151 = vand.u32 %v150, 4294901760
    %v152 = vsub.f32 %v150, %v151
    %v153 = vand.u32 %v152, 4294901760
    %154 = vmatpush1.msra.mxu0 %v153
    %155 = vmatprep.subr.mxu0 0.0
    %v156 = vand.u32 %v42, 4294901760
    %v157 = vsub.f32 %v42, %v156
    %v158 = vand.u32 %v157, 4294901760
    %v159 = vsub.f32 %v157, %v158
    %v160 = vand.u32 %v159, 4294901760
    %161 = vmatpush1.msra.mxu0 %v160
    %162 = vmatprep.subr.mxu0 0.0
    %v163 = vand.u32 %v43, 4294901760
    %v164 = vsub.f32 %v43, %v163
    %v165 = vand.u32 %v164, 4294901760
    %v166 = vsub.f32 %v164, %v165
    %v167 = vand.u32 %v166, 4294901760
    %168 = vmatpush1.msra.mxu0 %v167
    %169 = vmatprep.subr.mxu0 0.0
    %v170 = vand.u32 %v44, 4294901760
    %v171 = vsub.f32 %v44, %v170
    %v172 = vand.u32 %v171, 4294901760
    %v173 = vsub.f32 %v171, %v172
    %v174 = vand.u32 %v173, 4294901760
    %175 = vmatpush1.msra.mxu0 %v174
    %176 = vmatprep.subr.mxu0 0.0
    %v177 = vand.u32 %v45, 4294901760
    %v178 = vsub.f32 %v45, %v177
    %v179 = vand.u32 %v178, 4294901760
    %v180 = vsub.f32 %v178, %v179
    %v181 = vand.u32 %v180, 4294901760
    %182 = vmatpush1.msra.mxu0 %v181
    %183 = vmatprep.subr.mxu0 0.0
    %v184 = vand.u32 %v46, 4294901760
    %v185 = vsub.f32 %v46, %v184
    %v186 = vand.u32 %v185, 4294901760
    %v187 = vsub.f32 %v185, %v186
    %v188 = vand.u32 %v187, 4294901760
    %189 = vmatpush1.msra.mxu0 %v188
    %190 = vmatprep.subr.mxu0 0.0
    %v191 = vand.u32 %v47, 4294901760
    %v192 = vsub.f32 %v47, %v191
    %v193 = vand.u32 %v192, 4294901760
    %v194 = vsub.f32 %v192, %v193
    %v195 = vand.u32 %v194, 4294901760
    %196 = vmatpush1.msra.mxu0 %v195
    %197 = vmatprep.subr.mxu0 0.0
    %v198 = vand.u32 %v48, 4294901760
    %v199 = vsub.f32 %v48, %v198
    %v200 = vand.u32 %v199, 4294901760
    %v201 = vsub.f32 %v199, %v200
    %v202 = vand.u32 %v201, 4294901760
    %203 = vmatpush1.msra.mxu0 %v202
    %204 = vmatprep.subr.mxu0 0.0
    %v205 = vand.u32 %v49, 4294901760
    %v206 = vsub.f32 %v49, %v205
    %v207 = vand.u32 %v206, 4294901760
    %v208 = vsub.f32 %v206, %v207
    %v209 = vand.u32 %v208, 4294901760
    %210 = vmatpush1.msra.mxu0 %v209
    %211 = vmatprep.subr.mxu0 0.0
    %v212 = vand.u32 %v50, 4294901760
    %v213 = vsub.f32 %v50, %v212
    %v214 = vand.u32 %v213, 4294901760
    %v215 = vsub.f32 %v213, %v214
    %v216 = vand.u32 %v215, 4294901760
    %217 = vmatpush1.msra.mxu0 %v216
    %218 = vmatprep.subr.mxu0 0.0
    %v219 = vand.u32 %v51, 4294901760
    %v220 = vsub.f32 %v51, %v219
    %v221 = vand.u32 %v220, 4294901760
    %v222 = vsub.f32 %v220, %v221
    %v223 = vand.u32 %v222, 4294901760
    %224 = vmatpush1.msra.mxu0 %v223
    %225 = vmatprep.subr.mxu0 0.0
    %v226 = vand.u32 %v52, 4294901760
    %v227 = vsub.f32 %v52, %v226
    %v228 = vand.u32 %v227, 4294901760
    %v229 = vsub.f32 %v227, %v228
    %v230 = vand.u32 %v229, 4294901760
    %231 = vmatpush1.msra.mxu0 %v230
    %232 = vmatprep.subr.mxu0 0.0
    %v233 = vand.u32 %v53, 4294901760
    %v234 = vsub.f32 %v53, %v233
    %v235 = vand.u32 %v234, 4294901760
    %v236 = vsub.f32 %v234, %v235
    %v237 = vand.u32 %v236, 4294901760
    %238 = vmatpush1.msra.mxu0 %v237
    %239 = vmatprep.subr.mxu0 0.0
    %v240 = vand.u32 %v54, 4294901760
    %v241 = vsub.f32 %v54, %v240
    %v242 = vand.u32 %v241, 4294901760
    %v243 = vsub.f32 %v241, %v242
    %v244 = vand.u32 %v243, 4294901760
    %245 = vmatpush1.msra.mxu0 %v244
    %246 = vmatprep.subr.mxu0 0.0
    %v247 = vand.u32 %v55, 4294901760
    %v248 = vsub.f32 %v55, %v247
    %v249 = vand.u32 %v248, 4294901760
    %v250 = vsub.f32 %v248, %v249
    %v251 = vand.u32 %v250, 4294901760
    %252 = vmatpush1.msra.mxu0 %v251
    %253 = vmatprep.subr.mxu0 0.0
    %v254 = vand.u32 %v56, 4294901760
    %v255 = vsub.f32 %v56, %v254
    %v256 = vand.u32 %v255, 4294901760
    %v257 = vsub.f32 %v255, %v256
    %v258 = vand.u32 %v257, 4294901760
    %259 = vmatpush1.msra.mxu0 %v258
    %260 = vmatprep.subr.mxu0 0.0
    %261 = vmatpush1.msra.mxu0 0.0
    %262 = vmatprep.subr.mxu0 0.0
    %263 = vmatpush1.msra.mxu0 0.0
    %264 = vmatprep.subr.mxu0 0.0
    %265 = vmatpush1.msra.mxu0 0.0
    %266 = vmatprep.subr.mxu0 0.0
    %267 = vmatpush1.msra.mxu0 0.0
    %268 = vmatprep.subr.mxu0 0.0
    %269 = vmatpush1.msra.mxu0 0.0
    %270 = vmatprep.subr.mxu0 0.0
    %271 = vmatpush1.msra.mxu0 0.0
    %272 = vmatprep.subr.mxu0 0.0
    %273 = vmatpush1.msra.mxu0 0.0
    %274 = vmatprep.subr.mxu0 0.0
    %275 = vmatpush1.msra.mxu0 0.0
    %276 = vmatprep.subr.mxu0 0.0
    %277 = vmatpush1.msra.mxu0 0.0
    %278 = vmatprep.subr.mxu0 0.0
    %279 = vmatpush1.msra.mxu0 0.0
    %280 = vmatprep.subr.mxu0 0.0
    %281 = vmatpush1.msra.mxu0 0.0
    %282 = vmatprep.subr.mxu0 0.0
    %283 = vmatpush1.msra.mxu0 0.0
    %284 = vmatprep.subr.mxu0 0.0
    %285 = vmatpush1.msra.mxu0 0.0
    %286 = vmatprep.subr.mxu0 0.0
    %287 = vmatpush1.msra.mxu0 0.0
    %288 = vmatprep.subr.mxu0 0.0
    %289 = vmatpush1.msra.mxu0 0.0
    %290 = vmatprep.subr.mxu0 0.0
    %291 = vmatpush1.msra.mxu0 0.0
    %292 = vmatprep.mubr.f32.mxu0 0.0
    %v293 = vand.u32 %v40, 4294901760
    %294 = vmatmul.mubr.f32.gmra.mrb[0].mxu0 %v293
    %v295 = vpop.f32.mrb[0].mxu0
    %v296 = vadd.f32 %v145, %v295
    %v297 = vpop.f32.mrb[0].mxu0
    %298 = vdwg.mxu0
    %299 = vmatprep.subr.mxu0 0.0
    %v300 = vand.u32 %v41, 4294901760
    %v301 = vsub.f32 %v41, %v300
    %302 = vmatpush1.msra.mxu0 %v301
    %303 = vmatprep.subr.mxu0 0.0
    %v304 = vand.u32 %v42, 4294901760
    %v305 = vsub.f32 %v42, %v304
    %306 = vmatpush1.msra.mxu0 %v305
    %307 = vmatprep.subr.mxu0 0.0
    %v308 = vand.u32 %v43, 4294901760
    %v309 = vsub.f32 %v43, %v308
    %310 = vmatpush1.msra.mxu0 %v309
    %311 = vmatprep.subr.mxu0 0.0
    %v312 = vand.u32 %v44, 4294901760
    %v313 = vsub.f32 %v44, %v312
    %314 = vmatpush1.msra.mxu0 %v313
    %315 = vmatprep.subr.mxu0 0.0
    %v316 = vand.u32 %v45, 4294901760
    %v317 = vsub.f32 %v45, %v316
    %318 = vmatpush1.msra.mxu0 %v317
    %319 = vmatprep.subr.mxu0 0.0
    %v320 = vand.u32 %v46, 4294901760
    %v321 = vsub.f32 %v46, %v320
    %322 = vmatpush1.msra.mxu0 %v321
    %323 = vmatprep.subr.mxu0 0.0
    %v324 = vand.u32 %v47, 4294901760
    %v325 = vsub.f32 %v47, %v324
    %326 = vmatpush1.msra.mxu0 %v325
    %327 = vmatprep.subr.mxu0 0.0
    %v328 = vand.u32 %v48, 4294901760
    %v329 = vsub.f32 %v48, %v328
    %330 = vmatpush1.msra.mxu0 %v329
    %331 = vmatprep.subr.mxu0 0.0
    %v332 = vand.u32 %v49, 4294901760
    %v333 = vsub.f32 %v49, %v332
    %334 = vmatpush1.msra.mxu0 %v333
    %335 = vmatprep.subr.mxu0 0.0
    %v336 = vand.u32 %v50, 4294901760
    %v337 = vsub.f32 %v50, %v336
    %338 = vmatpush1.msra.mxu0 %v337
    %339 = vmatprep.subr.mxu0 0.0
    %v340 = vand.u32 %v51, 4294901760
    %v341 = vsub.f32 %v51, %v340
    %342 = vmatpush1.msra.mxu0 %v341
    %343 = vmatprep.subr.mxu0 0.0
    %v344 = vand.u32 %v52, 4294901760
    %v345 = vsub.f32 %v52, %v344
    %346 = vmatpush1.msra.mxu0 %v345
    %347 = vmatprep.subr.mxu0 0.0
    %v348 = vand.u32 %v53, 4294901760
    %v349 = vsub.f32 %v53, %v348
    %350 = vmatpush1.msra.mxu0 %v349
    %351 = vmatprep.subr.mxu0 0.0
    %v352 = vand.u32 %v54, 4294901760
    %v353 = vsub.f32 %v54, %v352
    %354 = vmatpush1.msra.mxu0 %v353
    %355 = vmatprep.subr.mxu0 0.0
    %v356 = vand.u32 %v55, 4294901760
    %v357 = vsub.f32 %v55, %v356
    %358 = vmatpush1.msra.mxu0 %v357
    %359 = vmatprep.subr.mxu0 0.0
    %v360 = vand.u32 %v56, 4294901760
    %v361 = vsub.f32 %v56, %v360
    %362 = vmatpush1.msra.mxu0 %v361
    %363 = vmatprep.subr.mxu0 0.0
    %364 = vmatpush1.msra.mxu0 0.0
    %365 = vmatprep.subr.mxu0 0.0
    %366 = vmatpush1.msra.mxu0 0.0
    %367 = vmatprep.subr.mxu0 0.0
    %368 = vmatpush1.msra.mxu0 0.0
    %369 = vmatprep.subr.mxu0 0.0
    %370 = vmatpush1.msra.mxu0 0.0
    %371 = vmatprep.subr.mxu0 0.0
    %372 = vmatpush1.msra.mxu0 0.0
    %373 = vmatprep.subr.mxu0 0.0
    %374 = vmatpush1.msra.mxu0 0.0
    %375 = vmatprep.subr.mxu0 0.0
    %376 = vmatpush1.msra.mxu0 0.0
    %377 = vmatprep.subr.mxu0 0.0
    %378 = vmatpush1.msra.mxu0 0.0
    %379 = vmatprep.subr.mxu0 0.0
    %380 = vmatpush1.msra.mxu0 0.0
    %381 = vmatprep.subr.mxu0 0.0
    %382 = vmatpush1.msra.mxu0 0.0
    %383 = vmatprep.subr.mxu0 0.0
    %384 = vmatpush1.msra.mxu0 0.0
    %385 = vmatprep.subr.mxu0 0.0
    %386 = vmatpush1.msra.mxu0 0.0
    %387 = vmatprep.subr.mxu0 0.0
    %388 = vmatpush1.msra.mxu0 0.0
    %389 = vmatprep.subr.mxu0 0.0
    %390 = vmatpush1.msra.mxu0 0.0
    %391 = vmatprep.subr.mxu0 0.0
    %392 = vmatpush1.msra.mxu0 0.0
    %393 = vmatprep.subr.mxu0 0.0
    %394 = vmatpush1.msra.mxu0 0.0
    %395 = vmatprep.mubr.f32.mxu0 0.0
    %v396 = vand.u32 %v40, 4294901760
    %v397 = vsub.f32 %v40, %v396
    %398 = vmatmul.mubr.f32.gmra.mrb[0].mxu0 %v397
    %v399 = vpop.f32.mrb[0].mxu0
    %v400 = vadd.f32 %v296, %v399
    %v401 = vpop.f32.mrb[0].mxu0
    %402 = vdwg.mxu0
    %403 = vmatprep.subr.mxu0 0.0
    %v404 = vand.u32 %v41, 4294901760
    %405 = vmatpush1.msra.mxu0 %v404
    %406 = vmatprep.subr.mxu0 0.0
    %v407 = vand.u32 %v42, 4294901760
    %408 = vmatpush1.msra.mxu0 %v407
    %409 = vmatprep.subr.mxu0 0.0
    %v410 = vand.u32 %v43, 4294901760
    %411 = vmatpush1.msra.mxu0 %v410
    %412 = vmatprep.subr.mxu0 0.0
    %v413 = vand.u32 %v44, 4294901760
    %414 = vmatpush1.msra.mxu0 %v413
    %415 = vmatprep.subr.mxu0 0.0
    %v416 = vand.u32 %v45, 4294901760
    %417 = vmatpush1.msra.mxu0 %v416
    %418 = vmatprep.subr.mxu0 0.0
    %v419 = vand.u32 %v46, 4294901760
    %420 = vmatpush1.msra.mxu0 %v419
    %421 = vmatprep.subr.mxu0 0.0
    %v422 = vand.u32 %v47, 4294901760
    %423 = vmatpush1.msra.mxu0 %v422
    %424 = vmatprep.subr.mxu0 0.0
    %v425 = vand.u32 %v48, 4294901760
    %426 = vmatpush1.msra.mxu0 %v425
    %427 = vmatprep.subr.mxu0 0.0
    %v428 = vand.u32 %v49, 4294901760
    %429 = vmatpush1.msra.mxu0 %v428
    %430 = vmatprep.subr.mxu0 0.0
    %v431 = vand.u32 %v50, 4294901760
    %432 = vmatpush1.msra.mxu0 %v431
    %433 = vmatprep.subr.mxu0 0.0
    %v434 = vand.u32 %v51, 4294901760
    %435 = vmatpush1.msra.mxu0 %v434
    %436 = vmatprep.subr.mxu0 0.0
    %v437 = vand.u32 %v52, 4294901760
    %438 = vmatpush1.msra.mxu0 %v437
    %439 = vmatprep.subr.mxu0 0.0
    %v440 = vand.u32 %v53, 4294901760
    %441 = vmatpush1.msra.mxu0 %v440
    %442 = vmatprep.subr.mxu0 0.0
    %v443 = vand.u32 %v54, 4294901760
    %444 = vmatpush1.msra.mxu0 %v443
    %445 = vmatprep.subr.mxu0 0.0
    %v446 = vand.u32 %v55, 4294901760
    %447 = vmatpush1.msra.mxu0 %v446
    %448 = vmatprep.subr.mxu0 0.0
    %v449 = vand.u32 %v56, 4294901760
    %450 = vmatpush1.msra.mxu0 %v449
    %451 = vmatprep.subr.mxu0 0.0
    %452 = vmatpush1.msra.mxu0 0.0
    %453 = vmatprep.subr.mxu0 0.0
    %454 = vmatpush1.msra.mxu0 0.0
    %455 = vmatprep.subr.mxu0 0.0
    %456 = vmatpush1.msra.mxu0 0.0
    %457 = vmatprep.subr.mxu0 0.0
    %458 = vmatpush1.msra.mxu0 0.0
    %459 = vmatprep.subr.mxu0 0.0
    %460 = vmatpush1.msra.mxu0 0.0
    %461 = vmatprep.subr.mxu0 0.0
    %462 = vmatpush1.msra.mxu0 0.0
    %463 = vmatprep.subr.mxu0 0.0
    %464 = vmatpush1.msra.mxu0 0.0
    %465 = vmatprep.subr.mxu0 0.0
    %466 = vmatpush1.msra.mxu0 0.0
    %467 = vmatprep.subr.mxu0 0.0
    %468 = vmatpush1.msra.mxu0 0.0
    %469 = vmatprep.subr.mxu0 0.0
    %470 = vmatpush1.msra.mxu0 0.0
    %471 = vmatprep.subr.mxu0 0.0
    %472 = vmatpush1.msra.mxu0 0.0
    %473 = vmatprep.subr.mxu0 0.0
    %474 = vmatpush1.msra.mxu0 0.0
    %475 = vmatprep.subr.mxu0 0.0
    %476 = vmatpush1.msra.mxu0 0.0
    %477 = vmatprep.subr.mxu0 0.0
    %478 = vmatpush1.msra.mxu0 0.0
    %479 = vmatprep.subr.mxu0 0.0
    %480 = vmatpush1.msra.mxu0 0.0
    %481 = vmatprep.subr.mxu0 0.0
    %482 = vmatpush1.msra.mxu0 0.0
    %483 = vmatprep.mubr.f32.mxu0 0.0
    %v484 = vand.u32 %v40, 4294901760
    %v485 = vsub.f32 %v40, %v484
    %v486 = vand.u32 %v485, 4294901760
    %487 = vmatmul.mubr.f32.gmra.mrb[0].mxu0 %v486
    %v488 = vpop.f32.mrb[0].mxu0
    %v489 = vadd.f32 %v400, %v488
    %v490 = vpop.f32.mrb[0].mxu0
    %491 = vdwg.mxu0
    %492 = vmatprep.subr.mxu0 0.0
    %v493 = vand.u32 %v41, 4294901760
    %v494 = vsub.f32 %v41, %v493
    %v495 = vand.u32 %v494, 4294901760
    %496 = vmatpush1.msra.mxu0 %v495
    %497 = vmatprep.subr.mxu0 0.0
    %v498 = vand.u32 %v42, 4294901760
    %v499 = vsub.f32 %v42, %v498
    %v500 = vand.u32 %v499, 4294901760
    %501 = vmatpush1.msra.mxu0 %v500
    %502 = vmatprep.subr.mxu0 0.0
    %v503 = vand.u32 %v43, 4294901760
    %v504 = vsub.f32 %v43, %v503
    %v505 = vand.u32 %v504, 4294901760
    %506 = vmatpush1.msra.mxu0 %v505
    %507 = vmatprep.subr.mxu0 0.0
    %v508 = vand.u32 %v44, 4294901760
    %v509 = vsub.f32 %v44, %v508
    %v510 = vand.u32 %v509, 4294901760
    %511 = vmatpush1.msra.mxu0 %v510
    %512 = vmatprep.subr.mxu0 0.0
    %v513 = vand.u32 %v45, 4294901760
    %v514 = vsub.f32 %v45, %v513
    %v515 = vand.u32 %v514, 4294901760
    %516 = vmatpush1.msra.mxu0 %v515
    %517 = vmatprep.subr.mxu0 0.0
    %v518 = vand.u32 %v46, 4294901760
    %v519 = vsub.f32 %v46, %v518
    %v520 = vand.u32 %v519, 4294901760
    %521 = vmatpush1.msra.mxu0 %v520
    %522 = vmatprep.subr.mxu0 0.0
    %v523 = vand.u32 %v47, 4294901760
    %v524 = vsub.f32 %v47, %v523
    %v525 = vand.u32 %v524, 4294901760
    %526 = vmatpush1.msra.mxu0 %v525
    %527 = vmatprep.subr.mxu0 0.0
    %v528 = vand.u32 %v48, 4294901760
    %v529 = vsub.f32 %v48, %v528
    %v530 = vand.u32 %v529, 4294901760
    %531 = vmatpush1.msra.mxu0 %v530
    %532 = vmatprep.subr.mxu0 0.0
    %v533 = vand.u32 %v49, 4294901760
    %v534 = vsub.f32 %v49, %v533
    %v535 = vand.u32 %v534, 4294901760
    %536 = vmatpush1.msra.mxu0 %v535
    %537 = vmatprep.subr.mxu0 0.0
    %v538 = vand.u32 %v50, 4294901760
    %v539 = vsub.f32 %v50, %v538
    %v540 = vand.u32 %v539, 4294901760
    %541 = vmatpush1.msra.mxu0 %v540
    %542 = vmatprep.subr.mxu0 0.0
    %v543 = vand.u32 %v51, 4294901760
    %v544 = vsub.f32 %v51, %v543
    %v545 = vand.u32 %v544, 4294901760
    %546 = vmatpush1.msra.mxu0 %v545
    %547 = vmatprep.subr.mxu0 0.0
    %v548 = vand.u32 %v52, 4294901760
    %v549 = vsub.f32 %v52, %v548
    %v550 = vand.u32 %v549, 4294901760
    %551 = vmatpush1.msra.mxu0 %v550
    %552 = vmatprep.subr.mxu0 0.0
    %v553 = vand.u32 %v53, 4294901760
    %v554 = vsub.f32 %v53, %v553
    %v555 = vand.u32 %v554, 4294901760
    %556 = vmatpush1.msra.mxu0 %v555
    %557 = vmatprep.subr.mxu0 0.0
    %v558 = vand.u32 %v54, 4294901760
    %v559 = vsub.f32 %v54, %v558
    %v560 = vand.u32 %v559, 4294901760
    %561 = vmatpush1.msra.mxu0 %v560
    %562 = vmatprep.subr.mxu0 0.0
    %v563 = vand.u32 %v55, 4294901760
    %v564 = vsub.f32 %v55, %v563
    %v565 = vand.u32 %v564, 4294901760
    %566 = vmatpush1.msra.mxu0 %v565
    %567 = vmatprep.subr.mxu0 0.0
    %v568 = vand.u32 %v56, 4294901760
    %v569 = vsub.f32 %v56, %v568
    %v570 = vand.u32 %v569, 4294901760
    %571 = vmatpush1.msra.mxu0 %v570
    %572 = vmatprep.subr.mxu0 0.0
    %573 = vmatpush1.msra.mxu0 0.0
    %574 = vmatprep.subr.mxu0 0.0
    %575 = vmatpush1.msra.mxu0 0.0
    %576 = vmatprep.subr.mxu0 0.0
    %577 = vmatpush1.msra.mxu0 0.0
    %578 = vmatprep.subr.mxu0 0.0
    %579 = vmatpush1.msra.mxu0 0.0
    %580 = vmatprep.subr.mxu0 0.0
    %581 = vmatpush1.msra.mxu0 0.0
    %582 = vmatprep.subr.mxu0 0.0
    %583 = vmatpush1.msra.mxu0 0.0
    %584 = vmatprep.subr.mxu0 0.0
    %585 = vmatpush1.msra.mxu0 0.0
    %586 = vmatprep.subr.mxu0 0.0
    %587 = vmatpush1.msra.mxu0 0.0
    %588 = vmatprep.subr.mxu0 0.0
    %589 = vmatpush1.msra.mxu0 0.0
    %590 = vmatprep.subr.mxu0 0.0
    %591 = vmatpush1.msra.mxu0 0.0
    %592 = vmatprep.subr.mxu0 0.0
    %593 = vmatpush1.msra.mxu0 0.0
    %594 = vmatprep.subr.mxu0 0.0
    %595 = vmatpush1.msra.mxu0 0.0
    %596 = vmatprep.subr.mxu0 0.0
    %597 = vmatpush1.msra.mxu0 0.0
    %598 = vmatprep.subr.mxu0 0.0
    %599 = vmatpush1.msra.mxu0 0.0
    %600 = vmatprep.subr.mxu0 0.0
    %601 = vmatpush1.msra.mxu0 0.0
    %602 = vmatprep.subr.mxu0 0.0
    %603 = vmatpush1.msra.mxu0 0.0
    %604 = vmatprep.mubr.f32.mxu0 0.0
    %v605 = vand.u32 %v40, 4294901760
    %606 = vmatmul.mubr.f32.gmra.mrb[0].mxu0 %v605
    %v607 = vpop.f32.mrb[0].mxu0
    %v608 = vadd.f32 %v489, %v607
    %v609 = vpop.f32.mrb[0].mxu0
    %610 = vdwg.mxu0
    %611 = vmatprep.subr.mxu0 0.0
    %v612 = vand.u32 %v41, 4294901760
    %613 = vmatpush1.msra.mxu0 %v612
    %614 = vmatprep.subr.mxu0 0.0
    %v615 = vand.u32 %v42, 4294901760
    %616 = vmatpush1.msra.mxu0 %v615
    %617 = vmatprep.subr.mxu0 0.0
    %v618 = vand.u32 %v43, 4294901760
    %619 = vmatpush1.msra.mxu0 %v618
    %620 = vmatprep.subr.mxu0 0.0
    %v621 = vand.u32 %v44, 4294901760
    %622 = vmatpush1.msra.mxu0 %v621
    %623 = vmatprep.subr.mxu0 0.0
    %v624 = vand.u32 %v45, 4294901760
    %625 = vmatpush1.msra.mxu0 %v624
    %626 = vmatprep.subr.mxu0 0.0
    %v627 = vand.u32 %v46, 4294901760
    %628 = vmatpush1.msra.mxu0 %v627
    %629 = vmatprep.subr.mxu0 0.0
    %v630 = vand.u32 %v47, 4294901760
    %631 = vmatpush1.msra.mxu0 %v630
    %632 = vmatprep.subr.mxu0 0.0
    %v633 = vand.u32 %v48, 4294901760
    %634 = vmatpush1.msra.mxu0 %v633
    %635 = vmatprep.subr.mxu0 0.0
    %v636 = vand.u32 %v49, 4294901760
    %637 = vmatpush1.msra.mxu0 %v636
    %638 = vmatprep.subr.mxu0 0.0
    %v639 = vand.u32 %v50, 4294901760
    %640 = vmatpush1.msra.mxu0 %v639
    %641 = vmatprep.subr.mxu0 0.0
    %v642 = vand.u32 %v51, 4294901760
    %643 = vmatpush1.msra.mxu0 %v642
    %644 = vmatprep.subr.mxu0 0.0
    %v645 = vand.u32 %v52, 4294901760
    %646 = vmatpush1.msra.mxu0 %v645
    %647 = vmatprep.subr.mxu0 0.0
    %v648 = vand.u32 %v53, 4294901760
    %649 = vmatpush1.msra.mxu0 %v648
    %650 = vmatprep.subr.mxu0 0.0
    %v651 = vand.u32 %v54, 4294901760
    %652 = vmatpush1.msra.mxu0 %v651
    %653 = vmatprep.subr.mxu0 0.0
    %v654 = vand.u32 %v55, 4294901760
    %655 = vmatpush1.msra.mxu0 %v654
    %656 = vmatprep.subr.mxu0 0.0
    %v657 = vand.u32 %v56, 4294901760
    %658 = vmatpush1.msra.mxu0 %v657
    %659 = vmatprep.subr.mxu0 0.0
    %660 = vmatpush1.msra.mxu0 0.0
    %661 = vmatprep.subr.mxu0 0.0
    %662 = vmatpush1.msra.mxu0 0.0
    %663 = vmatprep.subr.mxu0 0.0
    %664 = vmatpush1.msra.mxu0 0.0
    %665 = vmatprep.subr.mxu0 0.0
    %666 = vmatpush1.msra.mxu0 0.0
    %667 = vmatprep.subr.mxu0 0.0
    %668 = vmatpush1.msra.mxu0 0.0
    %669 = vmatprep.subr.mxu0 0.0
    %670 = vmatpush1.msra.mxu0 0.0
    %671 = vmatprep.subr.mxu0 0.0
    %672 = vmatpush1.msra.mxu0 0.0
    %673 = vmatprep.subr.mxu0 0.0
    %674 = vmatpush1.msra.mxu0 0.0
    %675 = vmatprep.subr.mxu0 0.0
    %676 = vmatpush1.msra.mxu0 0.0
    %677 = vmatprep.subr.mxu0 0.0
    %678 = vmatpush1.msra.mxu0 0.0
    %679 = vmatprep.subr.mxu0 0.0
    %680 = vmatpush1.msra.mxu0 0.0
    %681 = vmatprep.subr.mxu0 0.0
    %682 = vmatpush1.msra.mxu0 0.0
    %683 = vmatprep.subr.mxu0 0.0
    %684 = vmatpush1.msra.mxu0 0.0
    %685 = vmatprep.subr.mxu0 0.0
    %686 = vmatpush1.msra.mxu0 0.0
    %687 = vmatprep.subr.mxu0 0.0
    %688 = vmatpush1.msra.mxu0 0.0
    %689 = vmatprep.subr.mxu0 0.0
    %690 = vmatpush1.msra.mxu0 0.0
    %691 = vmatprep.mubr.f32.mxu0 0.0
    %v692 = vand.u32 %v40, 4294901760
    %693 = vmatmul.mubr.f32.gmra.mrb[0].mxu0 %v692
    %v694 = vpop.f32.mrb[0].mxu0
    %v695 = vadd.f32 %v608, %v694
    %v696 = vpop.f32.mrb[0].mxu0
    %697 = vdwg.mxu0
    %v698 = vmul.f32 %v695, 0.03125
    %v699 = vsub.f32 %v40, %v698
    %v700 = vmul.f32 %v699, %v699
    %701 = vmatprep.subr.mxu0 0.0
    %v702 = vand.u32 %v41, 4294901760
    %703 = vmatpush1.msra.mxu0 %v702
    %704 = vmatprep.subr.mxu0 0.0
    %v705 = vand.u32 %v42, 4294901760
    %706 = vmatpush1.msra.mxu0 %v705
    %707 = vmatprep.subr.mxu0 0.0
    %v708 = vand.u32 %v43, 4294901760
    %709 = vmatpush1.msra.mxu0 %v708
    %710 = vmatprep.subr.mxu0 0.0
    %v711 = vand.u32 %v44, 4294901760
    %712 = vmatpush1.msra.mxu0 %v711
    %713 = vmatprep.subr.mxu0 0.0
    %v714 = vand.u32 %v45, 4294901760
    %715 = vmatpush1.msra.mxu0 %v714
    %716 = vmatprep.subr.mxu0 0.0
    %v717 = vand.u32 %v46, 4294901760
    %718 = vmatpush1.msra.mxu0 %v717
    %719 = vmatprep.subr.mxu0 0.0
    %v720 = vand.u32 %v47, 4294901760
    %721 = vmatpush1.msra.mxu0 %v720
    %722 = vmatprep.subr.mxu0 0.0
    %v723 = vand.u32 %v48, 4294901760
    %724 = vmatpush1.msra.mxu0 %v723
    %725 = vmatprep.subr.mxu0 0.0
    %v726 = vand.u32 %v49, 4294901760
    %727 = vmatpush1.msra.mxu0 %v726
    %728 = vmatprep.subr.mxu0 0.0
    %v729 = vand.u32 %v50, 4294901760
    %730 = vmatpush1.msra.mxu0 %v729
    %731 = vmatprep.subr.mxu0 0.0
    %v732 = vand.u32 %v51, 4294901760
    %733 = vmatpush1.msra.mxu0 %v732
    %734 = vmatprep.subr.mxu0 0.0
    %v735 = vand.u32 %v52, 4294901760
    %736 = vmatpush1.msra.mxu0 %v735
    %737 = vmatprep.subr.mxu0 0.0
    %v738 = vand.u32 %v53, 4294901760
    %739 = vmatpush1.msra.mxu0 %v738
    %740 = vmatprep.subr.mxu0 0.0
    %v741 = vand.u32 %v54, 4294901760
    %742 = vmatpush1.msra.mxu0 %v741
    %743 = vmatprep.subr.mxu0 0.0
    %v744 = vand.u32 %v55, 4294901760
    %745 = vmatpush1.msra.mxu0 %v744
    %746 = vmatprep.subr.mxu0 0.0
    %v747 = vand.u32 %v56, 4294901760
    %748 = vmatpush1.msra.mxu0 %v747
    %749 = vmatprep.subr.mxu0 0.0
    %750 = vmatpush1.msra.mxu0 0.0
    %751 = vmatprep.subr.mxu0 0.0
    %752 = vmatpush1.msra.mxu0 0.0
    %753 = vmatprep.subr.mxu0 0.0
    %754 = vmatpush1.msra.mxu0 0.0
    %755 = vmatprep.subr.mxu0 0.0
    %756 = vmatpush1.msra.mxu0 0.0
    %757 = vmatprep.subr.mxu0 0.0
    %758 = vmatpush1.msra.mxu0 0.0
    %759 = vmatprep.subr.mxu0 0.0
    %760 = vmatpush1.msra.mxu0 0.0
    %761 = vmatprep.subr.mxu0 0.0
    %762 = vmatpush1.msra.mxu0 0.0
    %763 = vmatprep.subr.mxu0 0.0
    %764 = vmatpush1.msra.mxu0 0.0
    %765 = vmatprep.subr.mxu0 0.0
    %766 = vmatpush1.msra.mxu0 0.0
    %767 = vmatprep.subr.mxu0 0.0
    %768 = vmatpush1.msra.mxu0 0.0
    %769 = vmatprep.subr.mxu0 0.0
    %770 = vmatpush1.msra.mxu0 0.0
    %771 = vmatprep.subr.mxu0 0.0
    %772 = vmatpush1.msra.mxu0 0.0
    %773 = vmatprep.subr.mxu0 0.0
    %774 = vmatpush1.msra.mxu0 0.0
    %775 = vmatprep.subr.mxu0 0.0
    %776 = vmatpush1.msra.mxu0 0.0
    %777 = vmatprep.subr.mxu0 0.0
    %778 = vmatpush1.msra.mxu0 0.0
    %779 = vmatprep.subr.mxu0 0.0
    %780 = vmatpush1.msra.mxu0 0.0
    %781 = vmatprep.mubr.f32.mxu0 0.0
    %v782 = vand.u32 %v700, 4294901760
    %v783 = vsub.f32 %v700, %v782
    %v784 = vand.u32 %v783, 4294901760
    %v785 = vsub.f32 %v783, %v784
    %v786 = vand.u32 %v785, 4294901760
    %787 = vmatmul.mubr.f32.gmra.mrb[0].mxu0 %v786
    %v788 = vpop.f32.mrb[0].mxu0
    %v789 = vadd.f32 0.0, %v788
    %v790 = vpop.f32.mrb[0].mxu0
    %791 = vdwg.mxu0
    %792 = vmatprep.subr.mxu0 0.0
    %v793 = vand.u32 %v41, 4294901760
    %v794 = vsub.f32 %v41, %v793
    %v795 = vand.u32 %v794, 4294901760
    %v796 = vsub.f32 %v794, %v795
    %v797 = vand.u32 %v796, 4294901760
    %798 = vmatpush1.msra.mxu0 %v797
    %799 = vmatprep.subr.mxu0 0.0
    %v800 = vand.u32 %v42, 4294901760
    %v801 = vsub.f32 %v42, %v800
    %v802 = vand.u32 %v801, 4294901760
    %v803 = vsub.f32 %v801, %v802
    %v804 = vand.u32 %v803, 4294901760
    %805 = vmatpush1.msra.mxu0 %v804
    %806 = vmatprep.subr.mxu0 0.0
    %v807 = vand.u32 %v43, 4294901760
    %v808 = vsub.f32 %v43, %v807
    %v809 = vand.u32 %v808, 4294901760
    %v810 = vsub.f32 %v808, %v809
    %v811 = vand.u32 %v810, 4294901760
    %812 = vmatpush1.msra.mxu0 %v811
    %813 = vmatprep.subr.mxu0 0.0
    %v814 = vand.u32 %v44, 4294901760
    %v815 = vsub.f32 %v44, %v814
    %v816 = vand.u32 %v815, 4294901760
    %v817 = vsub.f32 %v815, %v816
    %v818 = vand.u32 %v817, 4294901760
    %819 = vmatpush1.msra.mxu0 %v818
    %820 = vmatprep.subr.mxu0 0.0
    %v821 = vand.u32 %v45, 4294901760
    %v822 = vsub.f32 %v45, %v821
    %v823 = vand.u32 %v822, 4294901760
    %v824 = vsub.f32 %v822, %v823
    %v825 = vand.u32 %v824, 4294901760
    %826 = vmatpush1.msra.mxu0 %v825
    %827 = vmatprep.subr.mxu0 0.0
    %v828 = vand.u32 %v46, 4294901760
    %v829 = vsub.f32 %v46, %v828
    %v830 = vand.u32 %v829, 4294901760
    %v831 = vsub.f32 %v829, %v830
    %v832 = vand.u32 %v831, 4294901760
    %833 = vmatpush1.msra.mxu0 %v832
    %834 = vmatprep.subr.mxu0 0.0
    %v835 = vand.u32 %v47, 4294901760
    %v836 = vsub.f32 %v47, %v835
    %v837 = vand.u32 %v836, 4294901760
    %v838 = vsub.f32 %v836, %v837
    %v839 = vand.u32 %v838, 4294901760
    %840 = vmatpush1.msra.mxu0 %v839
    %841 = vmatprep.subr.mxu0 0.0
    %v842 = vand.u32 %v48, 4294901760
    %v843 = vsub.f32 %v48, %v842
    %v844 = vand.u32 %v843, 4294901760
    %v845 = vsub.f32 %v843, %v844
    %v846 = vand.u32 %v845, 4294901760
    %847 = vmatpush1.msra.mxu0 %v846
    %848 = vmatprep.subr.mxu0 0.0
    %v849 = vand.u32 %v49, 4294901760
    %v850 = vsub.f32 %v49, %v849
    %v851 = vand.u32 %v850, 4294901760
    %v852 = vsub.f32 %v850, %v851
    %v853 = vand.u32 %v852, 4294901760
    %854 = vmatpush1.msra.mxu0 %v853
    %855 = vmatprep.subr.mxu0 0.0
    %v856 = vand.u32 %v50, 4294901760
    %v857 = vsub.f32 %v50, %v856
    %v858 = vand.u32 %v857, 4294901760
    %v859 = vsub.f32 %v857, %v858
    %v860 = vand.u32 %v859, 4294901760
    %861 = vmatpush1.msra.mxu0 %v860
    %862 = vmatprep.subr.mxu0 0.0
    %v863 = vand.u32 %v51, 4294901760
    %v864 = vsub.f32 %v51, %v863
    %v865 = vand.u32 %v864, 4294901760
    %v866 = vsub.f32 %v864, %v865
    %v867 = vand.u32 %v866, 4294901760
    %868 = vmatpush1.msra.mxu0 %v867
    %869 = vmatprep.subr.mxu0 0.0
    %v870 = vand.u32 %v52, 4294901760
    %v871 = vsub.f32 %v52, %v870
    %v872 = vand.u32 %v871, 4294901760
    %v873 = vsub.f32 %v871, %v872
    %v874 = vand.u32 %v873, 4294901760
    %875 = vmatpush1.msra.mxu0 %v874
    %876 = vmatprep.subr.mxu0 0.0
    %v877 = vand.u32 %v53, 4294901760
    %v878 = vsub.f32 %v53, %v877
    %v879 = vand.u32 %v878, 4294901760
    %v880 = vsub.f32 %v878, %v879
    %v881 = vand.u32 %v880, 4294901760
    %882 = vmatpush1.msra.mxu0 %v881
    %883 = vmatprep.subr.mxu0 0.0
    %v884 = vand.u32 %v54, 4294901760
    %v885 = vsub.f32 %v54, %v884
    %v886 = vand.u32 %v885, 4294901760
    %v887 = vsub.f32 %v885, %v886
    %v888 = vand.u32 %v887, 4294901760
    %889 = vmatpush1.msra.mxu0 %v888
    %890 = vmatprep.subr.mxu0 0.0
    %v891 = vand.u32 %v55, 4294901760
    %v892 = vsub.f32 %v55, %v891
    %v893 = vand.u32 %v892, 4294901760
    %v894 = vsub.f32 %v892, %v893
    %v895 = vand.u32 %v894, 4294901760
    %896 = vmatpush1.msra.mxu0 %v895
    %897 = vmatprep.subr.mxu0 0.0
    %v898 = vand.u32 %v56, 4294901760
    %v899 = vsub.f32 %v56, %v898
    %v900 = vand.u32 %v899, 4294901760
    %v901 = vsub.f32 %v899, %v900
    %v902 = vand.u32 %v901, 4294901760
    %903 = vmatpush1.msra.mxu0 %v902
    %904 = vmatprep.subr.mxu0 0.0
    %905 = vmatpush1.msra.mxu0 0.0
    %906 = vmatprep.subr.mxu0 0.0
    %907 = vmatpush1.msra.mxu0 0.0
    %908 = vmatprep.subr.mxu0 0.0
    %909 = vmatpush1.msra.mxu0 0.0
    %910 = vmatprep.subr.mxu0 0.0
    %911 = vmatpush1.msra.mxu0 0.0
    %912 = vmatprep.subr.mxu0 0.0
    %913 = vmatpush1.msra.mxu0 0.0
    %914 = vmatprep.subr.mxu0 0.0
    %915 = vmatpush1.msra.mxu0 0.0
    %916 = vmatprep.subr.mxu0 0.0
    %917 = vmatpush1.msra.mxu0 0.0
    %918 = vmatprep.subr.mxu0 0.0
    %919 = vmatpush1.msra.mxu0 0.0
    %920 = vmatprep.subr.mxu0 0.0
    %921 = vmatpush1.msra.mxu0 0.0
    %922 = vmatprep.subr.mxu0 0.0
    %923 = vmatpush1.msra.mxu0 0.0
    %924 = vmatprep.subr.mxu0 0.0
    %925 = vmatpush1.msra.mxu0 0.0
    %926 = vmatprep.subr.mxu0 0.0
    %927 = vmatpush1.msra.mxu0 0.0
    %928 = vmatprep.subr.mxu0 0.0
    %929 = vmatpush1.msra.mxu0 0.0
    %930 = vmatprep.subr.mxu0 0.0
    %931 = vmatpush1.msra.mxu0 0.0
    %932 = vmatprep.subr.mxu0 0.0
    %933 = vmatpush1.msra.mxu0 0.0
    %934 = vmatprep.subr.mxu0 0.0
    %935 = vmatpush1.msra.mxu0 0.0
    %936 = vmatprep.mubr.f32.mxu0 0.0
    %v937 = vand.u32 %v700, 4294901760
    %938 = vmatmul.mubr.f32.gmra.mrb[0].mxu0 %v937
    %v939 = vpop.f32.mrb[0].mxu0
    %v940 = vadd.f32 %v789, %v939
    %v941 = vpop.f32.mrb[0].mxu0
    %942 = vdwg.mxu0
    %943 = vmatprep.subr.mxu0 0.0
    %v944 = vand.u32 %v41, 4294901760
    %v945 = vsub.f32 %v41, %v944
    %946 = vmatpush1.msra.mxu0 %v945
    %947 = vmatprep.subr.mxu0 0.0
    %v948 = vand.u32 %v42, 4294901760
    %v949 = vsub.f32 %v42, %v948
    %950 = vmatpush1.msra.mxu0 %v949
    %951 = vmatprep.subr.mxu0 0.0
    %v952 = vand.u32 %v43, 4294901760
    %v953 = vsub.f32 %v43, %v952
    %954 = vmatpush1.msra.mxu0 %v953
    %955 = vmatprep.subr.mxu0 0.0
    %v956 = vand.u32 %v44, 4294901760
    %v957 = vsub.f32 %v44, %v956
    %958 = vmatpush1.msra.mxu0 %v957
    %959 = vmatprep.subr.mxu0 0.0
    %v960 = vand.u32 %v45, 4294901760
    %v961 = vsub.f32 %v45, %v960
    %962 = vmatpush1.msra.mxu0 %v961
    %963 = vmatprep.subr.mxu0 0.0
    %v964 = vand.u32 %v46, 4294901760
    %v965 = vsub.f32 %v46, %v964
    %966 = vmatpush1.msra.mxu0 %v965
    %967 = vmatprep.subr.mxu0 0.0
    %v968 = vand.u32 %v47, 4294901760
    %v969 = vsub.f32 %v47, %v968
    %970 = vmatpush1.msra.mxu0 %v969
    %971 = vmatprep.subr.mxu0 0.0
    %v972 = vand.u32 %v48, 4294901760
    %v973 = vsub.f32 %v48, %v972
    %974 = vmatpush1.msra.mxu0 %v973
    %975 = vmatprep.subr.mxu0 0.0
    %v976 = vand.u32 %v49, 4294901760
    %v977 = vsub.f32 %v49, %v976
    %978 = vmatpush1.msra.mxu0 %v977
    %979 = vmatprep.subr.mxu0 0.0
    %v980 = vand.u32 %v50, 4294901760
    %v981 = vsub.f32 %v50, %v980
    %982 = vmatpush1.msra.mxu0 %v981
    %983 = vmatprep.subr.mxu0 0.0
    %v984 = vand.u32 %v51, 4294901760
    %v985 = vsub.f32 %v51, %v984
    %986 = vmatpush1.msra.mxu0 %v985
    %987 = vmatprep.subr.mxu0 0.0
    %v988 = vand.u32 %v52, 4294901760
    %v989 = vsub.f32 %v52, %v988
    %990 = vmatpush1.msra.mxu0 %v989
    %991 = vmatprep.subr.mxu0 0.0
    %v992 = vand.u32 %v53, 4294901760
    %v993 = vsub.f32 %v53, %v992
    %994 = vmatpush1.msra.mxu0 %v993
    %995 = vmatprep.subr.mxu0 0.0
    %v996 = vand.u32 %v54, 4294901760
    %v997 = vsub.f32 %v54, %v996
    %998 = vmatpush1.msra.mxu0 %v997
    %999 = vmatprep.subr.mxu0 0.0
    %v1000 = vand.u32 %v55, 4294901760
    %v1001 = vsub.f32 %v55, %v1000
    %1002 = vmatpush1.msra.mxu0 %v1001
    %1003 = vmatprep.subr.mxu0 0.0
    %v1004 = vand.u32 %v56, 4294901760
    %v1005 = vsub.f32 %v56, %v1004
    %1006 = vmatpush1.msra.mxu0 %v1005
    %1007 = vmatprep.subr.mxu0 0.0
    %1008 = vmatpush1.msra.mxu0 0.0
    %1009 = vmatprep.subr.mxu0 0.0
    %1010 = vmatpush1.msra.mxu0 0.0
    %1011 = vmatprep.subr.mxu0 0.0
    %1012 = vmatpush1.msra.mxu0 0.0
    %1013 = vmatprep.subr.mxu0 0.0
    %1014 = vmatpush1.msra.mxu0 0.0
    %1015 = vmatprep.subr.mxu0 0.0
    %1016 = vmatpush1.msra.mxu0 0.0
    %1017 = vmatprep.subr.mxu0 0.0
    %1018 = vmatpush1.msra.mxu0 0.0
    %1019 = vmatprep.subr.mxu0 0.0
    %1020 = vmatpush1.msra.mxu0 0.0
    %1021 = vmatprep.subr.mxu0 0.0
    %1022 = vmatpush1.msra.mxu0 0.0
    %1023 = vmatprep.subr.mxu0 0.0
    %1024 = vmatpush1.msra.mxu0 0.0
    %1025 = vmatprep.subr.mxu0 0.0
    %1026 = vmatpush1.msra.mxu0 0.0
    %1027 = vmatprep.subr.mxu0 0.0
    %1028 = vmatpush1.msra.mxu0 0.0
    %1029 = vmatprep.subr.mxu0 0.0
    %1030 = vmatpush1.msra.mxu0 0.0
    %1031 = vmatprep.subr.mxu0 0.0
    %1032 = vmatpush1.msra.mxu0 0.0
    %1033 = vmatprep.subr.mxu0 0.0
    %1034 = vmatpush1.msra.mxu0 0.0
    %1035 = vmatprep.subr.mxu0 0.0
    %1036 = vmatpush1.msra.mxu0 0.0
    %1037 = vmatprep.subr.mxu0 0.0
    %1038 = vmatpush1.msra.mxu0 0.0
    %1039 = vmatprep.mubr.f32.mxu0 0.0
    %v1040 = vand.u32 %v700, 4294901760
    %v1041 = vsub.f32 %v700, %v1040
    %1042 = vmatmul.mubr.f32.gmra.mrb[0].mxu0 %v1041
    %v1043 = vpop.f32.mrb[0].mxu0
    %v1044 = vadd.f32 %v940, %v1043
    %v1045 = vpop.f32.mrb[0].mxu0
    %1046 = vdwg.mxu0
    %1047 = vmatprep.subr.mxu0 0.0
    %v1048 = vand.u32 %v41, 4294901760
    %1049 = vmatpush1.msra.mxu0 %v1048
    %1050 = vmatprep.subr.mxu0 0.0
    %v1051 = vand.u32 %v42, 4294901760
    %1052 = vmatpush1.msra.mxu0 %v1051
    %1053 = vmatprep.subr.mxu0 0.0
    %v1054 = vand.u32 %v43, 4294901760
    %1055 = vmatpush1.msra.mxu0 %v1054
    %1056 = vmatprep.subr.mxu0 0.0
    %v1057 = vand.u32 %v44, 4294901760
    %1058 = vmatpush1.msra.mxu0 %v1057
    %1059 = vmatprep.subr.mxu0 0.0
    %v1060 = vand.u32 %v45, 4294901760
    %1061 = vmatpush1.msra.mxu0 %v1060
    %1062 = vmatprep.subr.mxu0 0.0
    %v1063 = vand.u32 %v46, 4294901760
    %1064 = vmatpush1.msra.mxu0 %v1063
    %1065 = vmatprep.subr.mxu0 0.0
    %v1066 = vand.u32 %v47, 4294901760
    %1067 = vmatpush1.msra.mxu0 %v1066
    %1068 = vmatprep.subr.mxu0 0.0
    %v1069 = vand.u32 %v48, 4294901760
    %1070 = vmatpush1.msra.mxu0 %v1069
    %1071 = vmatprep.subr.mxu0 0.0
    %v1072 = vand.u32 %v49, 4294901760
    %1073 = vmatpush1.msra.mxu0 %v1072
    %1074 = vmatprep.subr.mxu0 0.0
    %v1075 = vand.u32 %v50, 4294901760
    %1076 = vmatpush1.msra.mxu0 %v1075
    %1077 = vmatprep.subr.mxu0 0.0
    %v1078 = vand.u32 %v51, 4294901760
    %1079 = vmatpush1.msra.mxu0 %v1078
    %1080 = vmatprep.subr.mxu0 0.0
    %v1081 = vand.u32 %v52, 4294901760
    %1082 = vmatpush1.msra.mxu0 %v1081
    %1083 = vmatprep.subr.mxu0 0.0
    %v1084 = vand.u32 %v53, 4294901760
    %1085 = vmatpush1.msra.mxu0 %v1084
    %1086 = vmatprep.subr.mxu0 0.0
    %v1087 = vand.u32 %v54, 4294901760
    %1088 = vmatpush1.msra.mxu0 %v1087
    %1089 = vmatprep.subr.mxu0 0.0
    %v1090 = vand.u32 %v55, 4294901760
    %1091 = vmatpush1.msra.mxu0 %v1090
    %1092 = vmatprep.subr.mxu0 0.0
    %v1093 = vand.u32 %v56, 4294901760
    %1094 = vmatpush1.msra.mxu0 %v1093
    %1095 = vmatprep.subr.mxu0 0.0
    %1096 = vmatpush1.msra.mxu0 0.0
    %1097 = vmatprep.subr.mxu0 0.0
    %1098 = vmatpush1.msra.mxu0 0.0
    %1099 = vmatprep.subr.mxu0 0.0
    %1100 = vmatpush1.msra.mxu0 0.0
    %1101 = vmatprep.subr.mxu0 0.0
    %1102 = vmatpush1.msra.mxu0 0.0
    %1103 = vmatprep.subr.mxu0 0.0
    %1104 = vmatpush1.msra.mxu0 0.0
    %1105 = vmatprep.subr.mxu0 0.0
    %1106 = vmatpush1.msra.mxu0 0.0
    %1107 = vmatprep.subr.mxu0 0.0
    %1108 = vmatpush1.msra.mxu0 0.0
    %1109 = vmatprep.subr.mxu0 0.0
    %1110 = vmatpush1.msra.mxu0 0.0
    %1111 = vmatprep.subr.mxu0 0.0
    %1112 = vmatpush1.msra.mxu0 0.0
    %1113 = vmatprep.subr.mxu0 0.0
    %1114 = vmatpush1.msra.mxu0 0.0
    %1115 = vmatprep.subr.mxu0 0.0
    %1116 = vmatpush1.msra.mxu0 0.0
    %1117 = vmatprep.subr.mxu0 0.0
    %1118 = vmatpush1.msra.mxu0 0.0
    %1119 = vmatprep.subr.mxu0 0.0
    %1120 = vmatpush1.msra.mxu0 0.0
    %1121 = vmatprep.subr.mxu0 0.0
    %1122 = vmatpush1.msra.mxu0 0.0
    %1123 = vmatprep.subr.mxu0 0.0
    %1124 = vmatpush1.msra.mxu0 0.0
    %1125 = vmatprep.subr.mxu0 0.0
    %1126 = vmatpush1.msra.mxu0 0.0
    %1127 = vmatprep.mubr.f32.mxu0 0.0
    %v1128 = vand.u32 %v700, 4294901760
    %v1129 = vsub.f32 %v700, %v1128
    %v1130 = vand.u32 %v1129, 4294901760
    %1131 = vmatmul.mubr.f32.gmra.mrb[0].mxu0 %v1130
    %v1132 = vpop.f32.mrb[0].mxu0
    %v1133 = vadd.f32 %v1044, %v1132
    %v1134 = vpop.f32.mrb[0].mxu0
    %1135 = vdwg.mxu0
    %1136 = vmatprep.subr.mxu0 0.0
    %v1137 = vand.u32 %v41, 4294901760
    %v1138 = vsub.f32 %v41, %v1137
    %v1139 = vand.u32 %v1138, 4294901760
    %1140 = vmatpush1.msra.mxu0 %v1139
    %1141 = vmatprep.subr.mxu0 0.0
    %v1142 = vand.u32 %v42, 4294901760
    %v1143 = vsub.f32 %v42, %v1142
    %v1144 = vand.u32 %v1143, 4294901760
    %1145 = vmatpush1.msra.mxu0 %v1144
    %1146 = vmatprep.subr.mxu0 0.0
    %v1147 = vand.u32 %v43, 4294901760
    %v1148 = vsub.f32 %v43, %v1147
    %v1149 = vand.u32 %v1148, 4294901760
    %1150 = vmatpush1.msra.mxu0 %v1149
    %1151 = vmatprep.subr.mxu0 0.0
    %v1152 = vand.u32 %v44, 4294901760
    %v1153 = vsub.f32 %v44, %v1152
    %v1154 = vand.u32 %v1153, 4294901760
    %1155 = vmatpush1.msra.mxu0 %v1154
    %1156 = vmatprep.subr.mxu0 0.0
    %v1157 = vand.u32 %v45, 4294901760
    %v1158 = vsub.f32 %v45, %v1157
    %v1159 = vand.u32 %v1158, 4294901760
    %1160 = vmatpush1.msra.mxu0 %v1159
    %1161 = vmatprep.subr.mxu0 0.0
    %v1162 = vand.u32 %v46, 4294901760
    %v1163 = vsub.f32 %v46, %v1162
    %v1164 = vand.u32 %v1163, 4294901760
    %1165 = vmatpush1.msra.mxu0 %v1164
    %1166 = vmatprep.subr.mxu0 0.0
    %v1167 = vand.u32 %v47, 4294901760
    %v1168 = vsub.f32 %v47, %v1167
    %v1169 = vand.u32 %v1168, 4294901760
    %1170 = vmatpush1.msra.mxu0 %v1169
    %1171 = vmatprep.subr.mxu0 0.0
    %v1172 = vand.u32 %v48, 4294901760
    %v1173 = vsub.f32 %v48, %v1172
    %v1174 = vand.u32 %v1173, 4294901760
    %1175 = vmatpush1.msra.mxu0 %v1174
    %1176 = vmatprep.subr.mxu0 0.0
    %v1177 = vand.u32 %v49, 4294901760
    %v1178 = vsub.f32 %v49, %v1177
    %v1179 = vand.u32 %v1178, 4294901760
    %1180 = vmatpush1.msra.mxu0 %v1179
    %1181 = vmatprep.subr.mxu0 0.0
    %v1182 = vand.u32 %v50, 4294901760
    %v1183 = vsub.f32 %v50, %v1182
    %v1184 = vand.u32 %v1183, 4294901760
    %1185 = vmatpush1.msra.mxu0 %v1184
    %1186 = vmatprep.subr.mxu0 0.0
    %v1187 = vand.u32 %v51, 4294901760
    %v1188 = vsub.f32 %v51, %v1187
    %v1189 = vand.u32 %v1188, 4294901760
    %1190 = vmatpush1.msra.mxu0 %v1189
    %1191 = vmatprep.subr.mxu0 0.0
    %v1192 = vand.u32 %v52, 4294901760
    %v1193 = vsub.f32 %v52, %v1192
    %v1194 = vand.u32 %v1193, 4294901760
    %1195 = vmatpush1.msra.mxu0 %v1194
    %1196 = vmatprep.subr.mxu0 0.0
    %v1197 = vand.u32 %v53, 4294901760
    %v1198 = vsub.f32 %v53, %v1197
    %v1199 = vand.u32 %v1198, 4294901760
    %1200 = vmatpush1.msra.mxu0 %v1199
    %1201 = vmatprep.subr.mxu0 0.0
    %v1202 = vand.u32 %v54, 4294901760
    %v1203 = vsub.f32 %v54, %v1202
    %v1204 = vand.u32 %v1203, 4294901760
    %1205 = vmatpush1.msra.mxu0 %v1204
    %1206 = vmatprep.subr.mxu0 0.0
    %v1207 = vand.u32 %v55, 4294901760
    %v1208 = vsub.f32 %v55, %v1207
    %v1209 = vand.u32 %v1208, 4294901760
    %1210 = vmatpush1.msra.mxu0 %v1209
    %1211 = vmatprep.subr.mxu0 0.0
    %v1212 = vand.u32 %v56, 4294901760
    %v1213 = vsub.f32 %v56, %v1212
    %v1214 = vand.u32 %v1213, 4294901760
    %1215 = vmatpush1.msra.mxu0 %v1214
    %1216 = vmatprep.subr.mxu0 0.0
    %1217 = vmatpush1.msra.mxu0 0.0
    %1218 = vmatprep.subr.mxu0 0.0
    %1219 = vmatpush1.msra.mxu0 0.0
    %1220 = vmatprep.subr.mxu0 0.0
    %1221 = vmatpush1.msra.mxu0 0.0
    %1222 = vmatprep.subr.mxu0 0.0
    %1223 = vmatpush1.msra.mxu0 0.0
    %1224 = vmatprep.subr.mxu0 0.0
    %1225 = vmatpush1.msra.mxu0 0.0
    %1226 = vmatprep.subr.mxu0 0.0
    %1227 = vmatpush1.msra.mxu0 0.0
    %1228 = vmatprep.subr.mxu0 0.0
    %1229 = vmatpush1.msra.mxu0 0.0
    %1230 = vmatprep.subr.mxu0 0.0
    %1231 = vmatpush1.msra.mxu0 0.0
    %1232 = vmatprep.subr.mxu0 0.0
    %1233 = vmatpush1.msra.mxu0 0.0
    %1234 = vmatprep.subr.mxu0 0.0
    %1235 = vmatpush1.msra.mxu0 0.0
    %1236 = vmatprep.subr.mxu0 0.0
    %1237 = vmatpush1.msra.mxu0 0.0
    %1238 = vmatprep.subr.mxu0 0.0
    %1239 = vmatpush1.msra.mxu0 0.0
    %1240 = vmatprep.subr.mxu0 0.0
    %1241 = vmatpush1.msra.mxu0 0.0
    %1242 = vmatprep.subr.mxu0 0.0
    %1243 = vmatpush1.msra.mxu0 0.0
    %1244 = vmatprep.subr.mxu0 0.0
    %1245 = vmatpush1.msra.mxu0 0.0
    %1246 = vmatprep.subr.mxu0 0.0
    %1247 = vmatpush1.msra.mxu0 0.0
    %1248 = vmatprep.mubr.f32.mxu0 0.0
    %v1249 = vand.u32 %v700, 4294901760
    %1250 = vmatmul.mubr.f32.gmra.mrb[0].mxu0 %v1249
    %v1251 = vpop.f32.mrb[0].mxu0
    %v1252 = vadd.f32 %v1133, %v1251
    %v1253 = vpop.f32.mrb[0].mxu0
    %1254 = vdwg.mxu0
    %1255 = vmatprep.subr.mxu0 0.0
    %v1256 = vand.u32 %v41, 4294901760
    %1257 = vmatpush1.msra.mxu0 %v1256
    %1258 = vmatprep.subr.mxu0 0.0
    %v1259 = vand.u32 %v42, 4294901760
    %1260 = vmatpush1.msra.mxu0 %v1259
    %1261 = vmatprep.subr.mxu0 0.0
    %v1262 = vand.u32 %v43, 4294901760
    %1263 = vmatpush1.msra.mxu0 %v1262
    %1264 = vmatprep.subr.mxu0 0.0
    %v1265 = vand.u32 %v44, 4294901760
    %1266 = vmatpush1.msra.mxu0 %v1265
    %1267 = vmatprep.subr.mxu0 0.0
    %v1268 = vand.u32 %v45, 4294901760
    %1269 = vmatpush1.msra.mxu0 %v1268
    %1270 = vmatprep.subr.mxu0 0.0
    %v1271 = vand.u32 %v46, 4294901760
    %1272 = vmatpush1.msra.mxu0 %v1271
    %1273 = vmatprep.subr.mxu0 0.0
    %v1274 = vand.u32 %v47, 4294901760
    %1275 = vmatpush1.msra.mxu0 %v1274
    %1276 = vmatprep.subr.mxu0 0.0
    %v1277 = vand.u32 %v48, 4294901760
    %1278 = vmatpush1.msra.mxu0 %v1277
    %1279 = vmatprep.subr.mxu0 0.0
    %v1280 = vand.u32 %v49, 4294901760
    %1281 = vmatpush1.msra.mxu0 %v1280
    %1282 = vmatprep.subr.mxu0 0.0
    %v1283 = vand.u32 %v50, 4294901760
    %1284 = vmatpush1.msra.mxu0 %v1283
    %1285 = vmatprep.subr.mxu0 0.0
    %v1286 = vand.u32 %v51, 4294901760
    %1287 = vmatpush1.msra.mxu0 %v1286
    %1288 = vmatprep.subr.mxu0 0.0
    %v1289 = vand.u32 %v52, 4294901760
    %1290 = vmatpush1.msra.mxu0 %v1289
    %1291 = vmatprep.subr.mxu0 0.0
    %v1292 = vand.u32 %v53, 4294901760
    %1293 = vmatpush1.msra.mxu0 %v1292
    %1294 = vmatprep.subr.mxu0 0.0
    %v1295 = vand.u32 %v54, 4294901760
    %1296 = vmatpush1.msra.mxu0 %v1295
    %1297 = vmatprep.subr.mxu0 0.0
    %v1298 = vand.u32 %v55, 4294901760
    %1299 = vmatpush1.msra.mxu0 %v1298
    %1300 = vmatprep.subr.mxu0 0.0
    %v1301 = vand.u32 %v56, 4294901760
    %1302 = vmatpush1.msra.mxu0 %v1301
    %1303 = vmatprep.subr.mxu0 0.0
    %1304 = vmatpush1.msra.mxu0 0.0
    %1305 = vmatprep.subr.mxu0 0.0
    %1306 = vmatpush1.msra.mxu0 0.0
    %1307 = vmatprep.subr.mxu0 0.0
    %1308 = vmatpush1.msra.mxu0 0.0
    %1309 = vmatprep.subr.mxu0 0.0
    %1310 = vmatpush1.msra.mxu0 0.0
    %1311 = vmatprep.subr.mxu0 0.0
    %1312 = vmatpush1.msra.mxu0 0.0
    %1313 = vmatprep.subr.mxu0 0.0
    %1314 = vmatpush1.msra.mxu0 0.0
    %1315 = vmatprep.subr.mxu0 0.0
    %1316 = vmatpush1.msra.mxu0 0.0
    %1317 = vmatprep.subr.mxu0 0.0
    %1318 = vmatpush1.msra.mxu0 0.0
    %1319 = vmatprep.subr.mxu0 0.0
    %1320 = vmatpush1.msra.mxu0 0.0
    %1321 = vmatprep.subr.mxu0 0.0
    %1322 = vmatpush1.msra.mxu0 0.0
    %1323 = vmatprep.subr.mxu0 0.0
    %1324 = vmatpush1.msra.mxu0 0.0
    %1325 = vmatprep.subr.mxu0 0.0
    %1326 = vmatpush1.msra.mxu0 0.0
    %1327 = vmatprep.subr.mxu0 0.0
    %1328 = vmatpush1.msra.mxu0 0.0
    %1329 = vmatprep.subr.mxu0 0.0
    %1330 = vmatpush1.msra.mxu0 0.0
    %1331 = vmatprep.subr.mxu0 0.0
    %1332 = vmatpush1.msra.mxu0 0.0
    %1333 = vmatprep.subr.mxu0 0.0
    %1334 = vmatpush1.msra.mxu0 0.0
    %1335 = vmatprep.mubr.f32.mxu0 0.0
    %v1336 = vand.u32 %v700, 4294901760
    %1337 = vmatmul.mubr.f32.gmra.mrb[0].mxu0 %v1336
    %v1338 = vpop.f32.mrb[0].mxu0
    %v1339 = vadd.f32 %v1252, %v1338
    %v1340 = vpop.f32.mrb[0].mxu0
    %1341 = vdwg.mxu0
    %v1342 = vmul.f32 %v1339, 0.03125
    %v1343 = vadd.f32 %v1342, 1e-05
    %v1344 = vlog2.pop %v1343
    %v1345 = vmul.f32 %v1344, 0.6931472
    %v1346 = vmul.f32 %v1345, -0.16666667
    %v1347 = vmul.f32 %v1346, 1.442695
    %v1348 = vpow.pop %v1347
    %v1349 = vmul.f32 %v40, %v1348
    %1350 = vst [vmem:[#allocation7] sm:$0xff] %v1349
    // Predicated region
    $region18: #{tpu_custom_call.1} parent=1 // pred_check
      _
    $region19: #{tpu_custom_call.1} parent=1 // pred_check_branch
      %1352 = sbr.rel (0) target = $region21
    $region20: #{tpu_custom_call.1} parent=1 // pred_region
      %s1354 = ssub.s32 128, 64
      %1355 = vsyncadd [#allocation4], %s1354
      %s1356 = sshll.u32 [#allocation7], 4
      %s1357 = int_to_ptr.vmem [resolvable:$true] %s1356
      %1362 = dma.vmem_to_hbm [thread:$0]  %s1357, 64, %s2, [#allocation4], 64, 64, 4
    $region21: #{tpu_custom_call.1} parent=1 // pred_fallthru
      _
    // Predicated region
    $region22: #{tpu_custom_call.1} parent=1 // pred_check
      _
    $region23: #{tpu_custom_call.1} parent=1 // pred_check_branch
      %1364 = sbr.rel (0) target = $region25
    $region24: #{tpu_custom_call.1} parent=1 // pred_region
      %1365 = dma.done [#allocation4], 128
    $region25: #{tpu_custom_call.1} parent=1 // pred_fallthru
      _
    %1366 = vsyncpa [#allocation3], 1
    %1367 = vsyncpa [#allocation6], 1
    %1368 = vsyncpa [#allocation4], 1

</llo_original>
